<compile_context>
chip_gen: v5e
topology: v5e:2x2
jax: 0.10.0
libtpu: 0.0.40
codegen_flags: <defaults>
</compile_context>

<pallas_src>
import functools

import jax
import jax.numpy as jnp
from jax.experimental import pallas as pl
from jax.experimental.pallas import tpu as pltpu

_LANE = 128        # vreg lane width
_MAX_TILE_R = 1024  # rows (of 128 lanes) per grid step; 1024x128 f32 = 512 KiB


def _round_up(x: int, m: int) -> int:
    return (x + m - 1) // m * m


def _bce_dice_kernel(x_ref, t_ref, bce_ref, pt_ref, p_ref, tsum_ref,
                     *, n_valid: int, tile_r: int, steps_per_core: int):
    c = pl.program_id(0)   # core-split axis ("parallel")
    i = pl.program_id(1)   # sequential accumulation axis ("arbitrary")

    @pl.when(i == 0)
    def _():
        bce_ref[...] = jnp.zeros_like(bce_ref)
        pt_ref[...] = jnp.zeros_like(pt_ref)
        p_ref[...] = jnp.zeros_like(p_ref)
        tsum_ref[...] = jnp.zeros_like(tsum_ref)

    # Global element index of every slot in this tile, using the *unclamped*
    # block index, so clamped / overrun tiles are masked to zero contribution.
    blk = c * steps_per_core + i
    row = jax.lax.broadcasted_iota(jnp.int32, (tile_r, _LANE), 0)
    lane = jax.lax.broadcasted_iota(jnp.int32, (tile_r, _LANE), 1)
    elem = (blk * tile_r + row) * _LANE + lane
    valid = elem < n_valid

    # Mask inputs first so unspecified OOB bytes can never poison exp/log.
    x = jnp.where(valid, x_ref[...].astype(jnp.float32), 0.0)
    t = jnp.where(valid, t_ref[...].astype(jnp.float32), 0.0)

    # Shared transcendentals:
    #   e   = exp(-|x|)
    #   inv = 1 / (1 + e)
    #   sigmoid(x) = inv      (x >= 0)      |  e * inv   (x < 0)
    #   bce(x, t)  = max(x, 0) - x*t + log1p(e)     (numerically stable)
    e = jnp.exp(-jnp.abs(x))
    inv = 1.0 / (1.0 + e)
    p = jnp.where(x >= 0.0, inv, e * inv)
    bce = jnp.maximum(x, 0.0) - x * t + jnp.log1p(e)

    zero = jnp.float32(0.0)
    bce_m = jnp.where(valid, bce, zero)
    p_m = jnp.where(valid, p, zero)
    # t is already zero on masked slots, so p*t and t need no extra select.

    groups = tile_r // 8  # tile_r is always a multiple of 8

    def _acc(ref, val):
        # Reduce (tile_r,128) -> (8,128) with plain vreg adds (VALU, no XLU),
        # then accumulate into the resident per-core output block.
        ref[0] += val.reshape(groups, 8, _LANE).sum(axis=0)

    _acc(bce_ref, bce_m)
    _acc(pt_ref, p_m * t)
    _acc(p_ref, p_m)
    _acc(tsum_ref, t)


def bce_dice_loss(logits: jax.Array, targets: jax.Array,
                  eps: float = 1e-9) -> jax.Array:
    assert logits.shape == targets.shape
    n = logits.size

    x = logits.reshape(-1)
    t = targets.reshape(-1)
    # Keep native floating dtypes on the wire (e.g. bf16 halves DMA traffic);
    # the kernel accumulates in f32 regardless.
    if not jnp.issubdtype(x.dtype, jnp.floating):
        x = x.astype(jnp.float32)
    if not jnp.issubdtype(t.dtype, jnp.floating):
        t = t.astype(jnp.float32)

    # Pad only to the next lane multiple (<=127 elems); typical segmentation
    # shapes have n % 128 == 0 so this branch is skipped -> no extra HBM pass.
    lane_pad = (-n) % _LANE
    if lane_pad:
        x = jnp.pad(x, (0, lane_pad))
        t = jnp.pad(t, (0, lane_pad))

    rows = (n + lane_pad) // _LANE
    x2 = x.reshape(rows, _LANE)
    t2 = t.reshape(rows, _LANE)

    tile_r = min(_MAX_TILE_R, _round_up(rows, 8))
    row_blocks = pl.cdiv(rows, tile_r)
    n_cores = 2                                  # v7x: 2 TCs; elsewhere: loop
    steps_per_core = pl.cdiv(row_blocks, n_cores)

    def in_map(c, i):
        # Clamp so a fully-out-of-range tile just re-reads the last valid
        # block; the kernel's iota mask zeroes its contribution.
        blk = c * steps_per_core + i
        return (jnp.minimum(blk, row_blocks - 1), 0)

    acc_shape = jax.ShapeDtypeStruct((n_cores, 8, _LANE), jnp.float32)
    acc_spec = pl.BlockSpec((1, 8, _LANE), lambda c, i: (c, 0, 0))

    kernel = functools.partial(
        _bce_dice_kernel,
        n_valid=n, tile_r=tile_r, steps_per_core=steps_per_core)

    s_bce, s_pt, s_p, s_t = pl.pallas_call(
        kernel,
        out_shape=(acc_shape, acc_shape, acc_shape, acc_shape),
        grid_spec=pltpu.PrefetchScalarGridSpec(
            num_scalar_prefetch=0,
            grid=(n_cores, steps_per_core),
            in_specs=[
                pl.BlockSpec((tile_r, _LANE), in_map),
                pl.BlockSpec((tile_r, _LANE), in_map),
            ],
            out_specs=[acc_spec, acc_spec, acc_spec, acc_spec],
        ),
        compiler_params=pltpu.CompilerParams(
            dimension_semantics=("parallel", "arbitrary"),
            vmem_limit_bytes=32 * 1024 * 1024,
        ),
    )(x2, t2)

    # Tiny final reductions (4 x n_cores x 8 x 128 floats) in plain JAX.
    bce_mean = jnp.sum(s_bce) / jnp.float32(n)
    # Matches the PyTorch module exactly: eps only in the numerator.
    dice_score = (2.0 * jnp.sum(s_pt) + eps) / (jnp.sum(s_p) + jnp.sum(s_t))
    dice_loss = 1.0 - dice_score
    return bce_mean + dice_loss


def _reference(logits, targets, eps=1e-9):
    x = logits.astype(jnp.float32)
    t = targets.astype(jnp.float32)
    p = jax.nn.sigmoid(x)
    bce = jnp.mean(jnp.maximum(x, 0.0) - x * t + jnp.log1p(jnp.exp(-jnp.abs(x))))
    dice = 1.0 - (2.0 * jnp.sum(p * t) + eps) / (jnp.sum(p) + jnp.sum(t))
    return bce + dice


if __name__ == "__main__":
    key = jax.random.PRNGKey(0)
    k1, k2 = jax.random.split(key)
    # NCHW, matching the PyTorch segmentation-loss use case.
    logits = jax.random.normal(k1, (2, 4, 16, 16), dtype=jnp.float32)
    targets = (jax.random.uniform(k2, (2, 4, 16, 16)) > 0.5).astype(jnp.float32)

    loss = bce_dice_loss(logits, targets)
    loss = jax.block_until_ready(loss)

    ref = jax.block_until_ready(_reference(logits, targets))
    assert jnp.allclose(loss, ref, rtol=1e-5, atol=1e-5), (loss, ref)

    print("KERNEL_OK")
</pallas_src>

<mosaic_0001>
module attributes {stable_mosaic.version = 11 : i64} {
  func.func @_bce_dice_kernel(%arg0: i32, %arg1: i32, %arg2: memref<16x128xf32, #tpu.memory_space<vmem>>, %arg3: memref<16x128xf32, #tpu.memory_space<vmem>>, %arg4: memref<1x8x128xf32, #tpu.memory_space<vmem>>, %arg5: memref<1x8x128xf32, #tpu.memory_space<vmem>>, %arg6: memref<1x8x128xf32, #tpu.memory_space<vmem>>, %arg7: memref<1x8x128xf32, #tpu.memory_space<vmem>>) attributes {dimension_semantics = [#tpu.dimension_semantics<parallel>, #tpu.dimension_semantics<arbitrary>], iteration_bounds = array<i64: 2, 1>, scalar_prefetch = 0 : i64, scratch_operands = 0 : i64, tpu.core_type = #tpu.core_type<tc>, window_params = [{transform_indices = @transform_0, window_bounds = array<i64: 16, 128>}, {transform_indices = @transform_1, window_bounds = array<i64: 16, 128>}, {transform_indices = @transform_2, window_bounds = array<i64: 1, 8, 128>}, {transform_indices = @transform_3, window_bounds = array<i64: 1, 8, 128>}, {transform_indices = @transform_4, window_bounds = array<i64: 1, 8, 128>}, {transform_indices = @transform_5, window_bounds = array<i64: 1, 8, 128>}]} {
    %c0_i32 = arith.constant 0 : i32
    %0 = arith.cmpi eq, %arg1, %c0_i32 : i32
    %1 = arith.extui %0 : i1 to i32
    %c0_i32_0 = arith.constant 0 : i32
    %2 = arith.cmpi ne, %1, %c0_i32_0 : i32
    scf.if %2 {
      %cst_40 = arith.constant 0.000000e+00 : f32
      %76 = vector.broadcast %cst_40 : f32 to vector<1x8x128xf32>
      %c0_41 = arith.constant 0 : index
      %c0_42 = arith.constant 0 : index
      %c0_43 = arith.constant 0 : index
      %77 = vector.load %arg4[%c0_41, %c0_42, %c0_43] : memref<1x8x128xf32, #tpu.memory_space<vmem>>, vector<1x8x128xf32>
      tpu.vector_store %arg4[%c0_41, %c0_42, %c0_43], %76 {strides = array<i32>} : memref<1x8x128xf32, #tpu.memory_space<vmem>>, vector<1x8x128xf32>,
      %cst_44 = arith.constant 0.000000e+00 : f32
      %78 = vector.broadcast %cst_44 : f32 to vector<1x8x128xf32>
      %c0_45 = arith.constant 0 : index
      %c0_46 = arith.constant 0 : index
      %c0_47 = arith.constant 0 : index
      %79 = vector.load %arg5[%c0_45, %c0_46, %c0_47] : memref<1x8x128xf32, #tpu.memory_space<vmem>>, vector<1x8x128xf32>
      tpu.vector_store %arg5[%c0_45, %c0_46, %c0_47], %78 {strides = array<i32>} : memref<1x8x128xf32, #tpu.memory_space<vmem>>, vector<1x8x128xf32>,
      %cst_48 = arith.constant 0.000000e+00 : f32
      %80 = vector.broadcast %cst_48 : f32 to vector<1x8x128xf32>
      %c0_49 = arith.constant 0 : index
      %c0_50 = arith.constant 0 : index
      %c0_51 = arith.constant 0 : index
      %81 = vector.load %arg6[%c0_49, %c0_50, %c0_51] : memref<1x8x128xf32, #tpu.memory_space<vmem>>, vector<1x8x128xf32>
      tpu.vector_store %arg6[%c0_49, %c0_50, %c0_51], %80 {strides = array<i32>} : memref<1x8x128xf32, #tpu.memory_space<vmem>>, vector<1x8x128xf32>,
      %cst_52 = arith.constant 0.000000e+00 : f32
      %82 = vector.broadcast %cst_52 : f32 to vector<1x8x128xf32>
      %c0_53 = arith.constant 0 : index
      %c0_54 = arith.constant 0 : index
      %c0_55 = arith.constant 0 : index
      %83 = vector.load %arg7[%c0_53, %c0_54, %c0_55] : memref<1x8x128xf32, #tpu.memory_space<vmem>>, vector<1x8x128xf32>
      tpu.vector_store %arg7[%c0_53, %c0_54, %c0_55], %82 {strides = array<i32>} : memref<1x8x128xf32, #tpu.memory_space<vmem>>, vector<1x8x128xf32>,
    } else {
    }
    %c1_i32 = arith.constant 1 : i32
    %3 = arith.muli %arg0, %c1_i32 : i32
    %4 = arith.addi %3, %arg1 : i32
    %5 = tpu.iota {dimensions = array<i32: 0>} : vector<16x128xi32>
    %6 = tpu.iota {dimensions = array<i32: 1>} : vector<16x128xi32>
    %c16_i32 = arith.constant 16 : i32
    %7 = arith.muli %4, %c16_i32 : i32
    %8 = vector.broadcast %7 : i32 to vector<16x128xi32>
    %9 = arith.addi %8, %5 : vector<16x128xi32>
    %c128_i32 = arith.constant 128 : i32
    %10 = vector.broadcast %c128_i32 : i32 to vector<16x128xi32>
    %11 = arith.muli %9, %10 : vector<16x128xi32>
    %12 = arith.addi %11, %6 : vector<16x128xi32>
    %c2048_i32 = arith.constant 2048 : i32
    %13 = vector.broadcast %c2048_i32 : i32 to vector<16x128xi32>
    %14 = arith.cmpi slt, %12, %13 : vector<16x128xi32>
    %c0 = arith.constant 0 : index
    %c0_1 = arith.constant 0 : index
    %15 = vector.load %arg2[%c0, %c0_1] : memref<16x128xf32, #tpu.memory_space<vmem>>, vector<16x128xf32>
    %cst = arith.constant 0.000000e+00 : f32
    %16 = vector.broadcast %cst : f32 to vector<16x128xf32>
    %17 = arith.select %14, %15, %16 : vector<16x128xi1>, vector<16x128xf32>
    %c0_2 = arith.constant 0 : index
    %c0_3 = arith.constant 0 : index
    %18 = vector.load %arg3[%c0_2, %c0_3] : memref<16x128xf32, #tpu.memory_space<vmem>>, vector<16x128xf32>
    %cst_4 = arith.constant 0.000000e+00 : f32
    %19 = vector.broadcast %cst_4 : f32 to vector<16x128xf32>
    %20 = arith.select %14, %18, %19 : vector<16x128xi1>, vector<16x128xf32>
    %21 = math.absf %17 : vector<16x128xf32>
    %cst_5 = arith.constant 0.000000e+00 : f32
    %22 = vector.broadcast %cst_5 : f32 to vector<16x128xf32>
    %23 = arith.subf %22, %21 : vector<16x128xf32>
    %24 = math.exp %23 : vector<16x128xf32>
    %cst_6 = arith.constant 1.000000e+00 : f32
    %25 = vector.broadcast %cst_6 : f32 to vector<16x128xf32>
    %26 = arith.addf %25, %24 : vector<16x128xf32>
    %cst_7 = arith.constant 1.000000e+00 : f32
    %27 = vector.broadcast %cst_7 : f32 to vector<16x128xf32>
    %28 = arith.divf %27, %26 : vector<16x128xf32>
    %cst_8 = arith.constant 0.000000e+00 : f32
    %29 = vector.broadcast %cst_8 : f32 to vector<16x128xf32>
    %30 = arith.cmpf oge, %17, %29 : vector<16x128xf32>
    %31 = arith.mulf %24, %28 : vector<16x128xf32>
    %32 = arith.select %30, %28, %31 : vector<16x128xi1>, vector<16x128xf32>
    %cst_9 = arith.constant 0.000000e+00 : f32
    %33 = vector.broadcast %cst_9 : f32 to vector<16x128xf32>
    %34 = arith.maximumf %17, %33 : vector<16x128xf32>
    %35 = arith.mulf %17, %20 : vector<16x128xf32>
    %36 = arith.subf %34, %35 : vector<16x128xf32>
    %37 = math.log1p %24 : vector<16x128xf32>
    %38 = arith.addf %36, %37 : vector<16x128xf32>
    %cst_10 = arith.constant 0.000000e+00 : f32
    %39 = vector.broadcast %cst_10 : f32 to vector<16x128xf32>
    %40 = arith.select %14, %38, %39 : vector<16x128xi1>, vector<16x128xf32>
    %cst_11 = arith.constant 0.000000e+00 : f32
    %41 = vector.broadcast %cst_11 : f32 to vector<16x128xf32>
    %42 = arith.select %14, %32, %41 : vector<16x128xi1>, vector<16x128xf32>
    %c0_12 = arith.constant 0 : index
    %c0_13 = arith.constant 0 : index
    %c0_14 = arith.constant 0 : index
    %43 = vector.load %arg4[%c0_12, %c0_13, %c0_14] : memref<1x8x128xf32, #tpu.memory_space<vmem>>, vector<1x8x128xf32>
    %44 = vector.shape_cast %43 : vector<1x8x128xf32> to vector<8x128xf32>
    %45 = vector.shape_cast %40 : vector<16x128xf32> to vector<2x8x128xf32>
    %cst_15 = arith.constant dense<0.000000e+00> : vector<8x128xf32>
    %46 = vector.multi_reduction <add>, %45, %cst_15 [0] : vector<2x8x128xf32> to vector<8x128xf32>
    %47 = arith.addf %44, %46 : vector<8x128xf32>
    %c0_16 = arith.constant 0 : index
    %c0_17 = arith.constant 0 : index
    %c0_18 = arith.constant 0 : index
    %48 = vector.load %arg4[%c0_16, %c0_17, %c0_18] : memref<1x8x128xf32, #tpu.memory_space<vmem>>, vector<1x8x128xf32>
    %49 = vector.shape_cast %48 : vector<1x8x128xf32> to vector<8x128xf32>
    %50 = vector.shape_cast %47 : vector<8x128xf32> to vector<1x8x128xf32>
    tpu.vector_store %arg4[%c0_16, %c0_17, %c0_18], %50 {strides = array<i32>} : memref<1x8x128xf32, #tpu.memory_space<vmem>>, vector<1x8x128xf32>,
    %51 = arith.mulf %42, %20 : vector<16x128xf32>
    %c0_19 = arith.constant 0 : index
    %c0_20 = arith.constant 0 : index
    %c0_21 = arith.constant 0 : index
    %52 = vector.load %arg5[%c0_19, %c0_20, %c0_21] : memref<1x8x128xf32, #tpu.memory_space<vmem>>, vector<1x8x128xf32>
    %53 = vector.shape_cast %52 : vector<1x8x128xf32> to vector<8x128xf32>
    %54 = vector.shape_cast %51 : vector<16x128xf32> to vector<2x8x128xf32>
    %cst_22 = arith.constant dense<0.000000e+00> : vector<8x128xf32>
    %55 = vector.multi_reduction <add>, %54, %cst_22 [0] : vector<2x8x128xf32> to vector<8x128xf32>
    %56 = arith.addf %53, %55 : vector<8x128xf32>
    %c0_23 = arith.constant 0 : index
    %c0_24 = arith.constant 0 : index
    %c0_25 = arith.constant 0 : index
    %57 = vector.load %arg5[%c0_23, %c0_24, %c0_25] : memref<1x8x128xf32, #tpu.memory_space<vmem>>, vector<1x8x128xf32>
    %58 = vector.shape_cast %57 : vector<1x8x128xf32> to vector<8x128xf32>
    %59 = vector.shape_cast %56 : vector<8x128xf32> to vector<1x8x128xf32>
    tpu.vector_store %arg5[%c0_23, %c0_24, %c0_25], %59 {strides = array<i32>} : memref<1x8x128xf32, #tpu.memory_space<vmem>>, vector<1x8x128xf32>,
    %c0_26 = arith.constant 0 : index
    %c0_27 = arith.constant 0 : index
    %c0_28 = arith.constant 0 : index
    %60 = vector.load %arg6[%c0_26, %c0_27, %c0_28] : memref<1x8x128xf32, #tpu.memory_space<vmem>>, vector<1x8x128xf32>
    %61 = vector.shape_cast %60 : vector<1x8x128xf32> to vector<8x128xf32>
    %62 = vector.shape_cast %42 : vector<16x128xf32> to vector<2x8x128xf32>
    %cst_29 = arith.constant dense<0.000000e+00> : vector<8x128xf32>
    %63 = vector.multi_reduction <add>, %62, %cst_29 [0] : vector<2x8x128xf32> to vector<8x128xf32>
    %64 = arith.addf %61, %63 : vector<8x128xf32>
    %c0_30 = arith.constant 0 : index
    %c0_31 = arith.constant 0 : index
    %c0_32 = arith.constant 0 : index
    %65 = vector.load %arg6[%c0_30, %c0_31, %c0_32] : memref<1x8x128xf32, #tpu.memory_space<vmem>>, vector<1x8x128xf32>
    %66 = vector.shape_cast %65 : vector<1x8x128xf32> to vector<8x128xf32>
    %67 = vector.shape_cast %64 : vector<8x128xf32> to vector<1x8x128xf32>
    tpu.vector_store %arg6[%c0_30, %c0_31, %c0_32], %67 {strides = array<i32>} : memref<1x8x128xf32, #tpu.memory_space<vmem>>, vector<1x8x128xf32>,
    %c0_33 = arith.constant 0 : index
    %c0_34 = arith.constant 0 : index
    %c0_35 = arith.constant 0 : index
    %68 = vector.load %arg7[%c0_33, %c0_34, %c0_35] : memref<1x8x128xf32, #tpu.memory_space<vmem>>, vector<1x8x128xf32>
    %69 = vector.shape_cast %68 : vector<1x8x128xf32> to vector<8x128xf32>
    %70 = vector.shape_cast %20 : vector<16x128xf32> to vector<2x8x128xf32>
    %cst_36 = arith.constant dense<0.000000e+00> : vector<8x128xf32>
    %71 = vector.multi_reduction <add>, %70, %cst_36 [0] : vector<2x8x128xf32> to vector<8x128xf32>
    %72 = arith.addf %69, %71 : vector<8x128xf32>
    %c0_37 = arith.constant 0 : index
    %c0_38 = arith.constant 0 : index
    %c0_39 = arith.constant 0 : index
    %73 = vector.load %arg7[%c0_37, %c0_38, %c0_39] : memref<1x8x128xf32, #tpu.memory_space<vmem>>, vector<1x8x128xf32>
    %74 = vector.shape_cast %73 : vector<1x8x128xf32> to vector<8x128xf32>
    %75 = vector.shape_cast %72 : vector<8x128xf32> to vector<1x8x128xf32>
    tpu.vector_store %arg7[%c0_37, %c0_38, %c0_39], %75 {strides = array<i32>} : memref<1x8x128xf32, #tpu.memory_space<vmem>>, vector<1x8x128xf32>,
    return
  }
  func.func @transform_0(%arg0: i32, %arg1: i32) -> (i32, i32) {
    %c1_i32 = arith.constant 1 : i32
    %0 = arith.muli %arg0, %c1_i32 : i32
    %1 = arith.addi %0, %arg1 : i32
    %c0_i32 = arith.constant 0 : i32
    %2 = arith.minsi %1, %c0_i32 : i32
    %c0_i32_0 = arith.constant 0 : i32
    %c0_i32_1 = arith.constant 0 : i32
    return %2, %c0_i32_0 : i32, i32
  }
  func.func @transform_1(%arg0: i32, %arg1: i32) -> (i32, i32) {
    %c1_i32 = arith.constant 1 : i32
    %0 = arith.muli %arg0, %c1_i32 : i32
    %1 = arith.addi %0, %arg1 : i32
    %c0_i32 = arith.constant 0 : i32
    %2 = arith.minsi %1, %c0_i32 : i32
    %c0_i32_0 = arith.constant 0 : i32
    %c0_i32_1 = arith.constant 0 : i32
    return %2, %c0_i32_0 : i32, i32
  }
  func.func @transform_2(%arg0: i32, %arg1: i32) -> (i32, i32, i32) {
    %c0_i32 = arith.constant 0 : i32
    %c0_i32_0 = arith.constant 0 : i32
    %c0_i32_1 = arith.constant 0 : i32
    return %arg0, %c0_i32, %c0_i32_0 : i32, i32, i32
  }
  func.func @transform_3(%arg0: i32, %arg1: i32) -> (i32, i32, i32) {
    %c0_i32 = arith.constant 0 : i32
    %c0_i32_0 = arith.constant 0 : i32
    %c0_i32_1 = arith.constant 0 : i32
    return %arg0, %c0_i32, %c0_i32_0 : i32, i32, i32
  }
  func.func @transform_4(%arg0: i32, %arg1: i32) -> (i32, i32, i32) {
    %c0_i32 = arith.constant 0 : i32
    %c0_i32_0 = arith.constant 0 : i32
    %c0_i32_1 = arith.constant 0 : i32
    return %arg0, %c0_i32, %c0_i32_0 : i32, i32, i32
  }
  func.func @transform_5(%arg0: i32, %arg1: i32) -> (i32, i32, i32) {
    %c0_i32 = arith.constant 0 : i32
    %c0_i32_0 = arith.constant 0 : i32
    %c0_i32_1 = arith.constant 0 : i32
    return %arg0, %c0_i32, %c0_i32_0 : i32, i32, i32
  }
}

</mosaic_0001>

<llo_original>
// kernel: tpu_custom_call.1
$region0: #{tpu_custom_call.1}
  #allocation0 [shape = 'u32[]', space=smem, size = 0x4, offset = 0x4, fixed_abs, tag = 'smem constant byte address 0x4 - core index']
  #allocation1 [shape = 'u32[72,128]{1,0:T(1,128)}', space=vmem, size = 0x9000, scoped, tag = 'internal scratch']
  %s0 = inlined_call_operand.hbm [shape: f32[16,128], index: 0, kind: input, shape index: {}]
  %s1 = inlined_call_operand.hbm [shape: f32[16,128], index: 1, kind: input, shape index: {}]
  %s2 = inlined_call_operand.hbm [shape: f32[2,8,128], index: 2, kind: output, shape index: {0}]
  %s3 = inlined_call_operand.hbm [shape: f32[2,8,128], index: 3, kind: output, shape index: {1}]
  %s4 = inlined_call_operand.hbm [shape: f32[2,8,128], index: 4, kind: output, shape index: {2}]
  %s5 = inlined_call_operand.hbm [shape: f32[2,8,128], index: 5, kind: output, shape index: {3}]
  %6 = xla_tuple %s2, %s3, %s4, %s5
  %s7 = sld [smem:[#allocation0]]
  $region77: #{tpu_custom_call.1} parent=0
    _
  %s9 = ssub.s32 1, %s7
  %s10 = scalar_select 0, %s9, %s7
  $region1: #{tpu_custom_call.1} parent=0
    #allocation2 [shape = 'u8[16384]{0}', space=vmem, size = 0x4000, scoped, tag = 'input window, operand 0']
    #allocation3 [shape = 's32[2]{0}', space=sflag, size = 0x8, scoped, tag = 'scoped memory for tpu_custom_call.1']
    #allocation4 [shape = 's32[2]{0}', space=sflag, size = 0x8, scoped, tag = 'scoped memory for tpu_custom_call.1']
    #allocation5 [shape = 'u8[16384]{0}', space=vmem, size = 0x4000, scoped, tag = 'input window, operand 1']
    #allocation6 [shape = 's32[2]{0}', space=sflag, size = 0x8, scoped, tag = 'scoped memory for tpu_custom_call.1']
    #allocation7 [shape = 'u8[8192]{0}', space=vmem, size = 0x2000, scoped, tag = 'output window, operand 0']
    #allocation8 [shape = 'u8[8192]{0}', space=vmem, size = 0x2000, scoped, tag = 'output window, operand 1']
    #allocation9 [shape = 's32[2]{0}', space=sflag, size = 0x8, scoped, tag = 'scoped memory for tpu_custom_call.1']
    #allocation10 [shape = 'u8[8192]{0}', space=vmem, size = 0x2000, scoped, tag = 'output window, operand 2']
    #allocation11 [shape = 'u8[8192]{0}', space=vmem, size = 0x2000, scoped, tag = 'output window, operand 3']
    #allocation12 [shape = 's32[2]{0}', space=sflag, size = 0x8, scoped, tag = 'scoped memory for tpu_custom_call.1']
    %11 = vsyncpa [#allocation3], 0
    %s12 = scalar_lea.sflag [#allocation3], 1
    %13 = vsyncpa %s12, 0
    %14 = vsyncpa [#allocation6], 0
    %s15 = scalar_lea.sflag [#allocation6], 1
    %16 = vsyncpa %s15, 0
    %17 = vsyncpa [#allocation4], 0
    %s18 = scalar_lea.sflag [#allocation4], 1
    %19 = vsyncpa %s18, 0
    %20 = vsyncpa [#allocation9], 0
    %s21 = scalar_lea.sflag [#allocation9], 1
    %22 = vsyncpa %s21, 0
    %23 = vsyncpa [#allocation12], 0
    %s24 = scalar_lea.sflag [#allocation12], 1
    %25 = vsyncpa %s24, 0
    loop: start=0, step=1, limit=4
    $region2: #{tpu_custom_call.1} parent=1 // loop_pre_header
      _
    $region3: #{tpu_custom_call.1} parent=1 // loop_header
      %s27 = sphi 0, %s31
      %p28 = scmp.ge.s32.totalorder %s27, 4
      %s34 = sphi 0, %s46
      %s35 = sphi 0, %s42
      %s36 = sphi 0, %s34
      %s37 = sphi 0, %s35
      %s38 = sphi 0, %s36
      %s39 = sphi 0, %s37
      %s55 = sphi 0, %s57
      %s58 = sphi 0, %s55
      %s59 = sphi 0, %s58
      %s75 = sphi 0, %s59
      %s87 = sphi 0, %s89
      %s90 = sphi 0, %s87
      %s91 = sphi 0, %s90
      %s107 = sphi 0, %s91
      %s113 = sphi 0, %s115
      %s116 = sphi 0, %s113
      %s117 = sphi 0, %s116
      %s133 = sphi 0, %s117
      %s139 = sphi 0, %s141
      %s142 = sphi 0, %s139
      %s143 = sphi 0, %s142
      %s159 = sphi 0, %s143
      %s165 = sphi 0, %s167
      %s168 = sphi 0, %s165
      %s169 = sphi 0, %s168
      %s185 = sphi 0, %s169
      %s191 = sphi 0, %s193
      %s194 = sphi 0, %s191
      %s195 = sphi 0, %s194
      %s211 = sphi 0, %s195
    $region4: #{tpu_custom_call.1} parent=1 // loop_header_branch
      %30 = sbr.rel (%p28) target = $region8
    $region5: #{tpu_custom_call.1} parent=1 // loop_body
      %s32 = ssub.s32 %s27, 1
      %s33 = ssub.s32 %s27, 2
      %s40 = sadd.s32 1, %s35
      %p41 = scmp.ge.s32.totalorder %s40, 1
      %s42 = scalar_select %p41, 0, %s40
      %s43 = sadd.s32 1, %s34
      %s44 = scalar_select %p41, %s43, %s34
      %p45 = scmp.ge.s32.totalorder %s44, 2
      %s46 = scalar_select %p45, 0, %s44
      %s47 = sadd.s32 %s34, %s35
      %p48 = scmp.lt.s32.totalorder %s47, 0
      %s49 = scalar_select %p48, %s47, 0
      %s50 = sadd.s32 %s46, %s42
      %p51 = scmp.lt.s32.totalorder %s50, 0
      %s52 = scalar_select %p51, %s50, 0
      %s53 = ssub.s32 %s49, %s52
      %p54 = scmp.eq.s32.totalorder %s53, 0
      %s56 = sadd.s32 %s55, 1
      %s57 = scalar_select %p54, %s55, %s56
      %p60 = pneg %p54
      %p61 = scmp.eq.s32.totalorder %s27, 1
      %p62 = por %p60, %p61
      %p63 = scmp.ne.s32.totalorder %s55, %s58
      %p64 = scmp.eq.s32.totalorder %s27, 0
      %p65 = por %p63, %p64
      %p66 = scmp.ne.s32.totalorder %s55, %s58
      %p67 = scmp.eq.s32.totalorder %s32, 1
      %p68 = por %p66, %p67
      %p69 = scmp.ne.s32.totalorder %s58, %s59
      %p70 = scmp.eq.s32.totalorder %s32, 0
      %p71 = por %p69, %p70
      %p72 = scmp.ne.s32.totalorder %s58, %s59
      %p73 = scmp.eq.s32.totalorder %s33, 1
      %p74 = por %p72, %p73
      %p76 = scmp.ne.s32.totalorder %s59, %s75
      %p77 = scmp.eq.s32.totalorder %s33, 0
      %p78 = por %p76, %p77
      %s79 = sadd.s32 %s34, %s35
      %p80 = scmp.lt.s32.totalorder %s79, 0
      %s81 = scalar_select %p80, %s79, 0
      %s82 = sadd.s32 %s46, %s42
      %p83 = scmp.lt.s32.totalorder %s82, 0
      %s84 = scalar_select %p83, %s82, 0
      %s85 = ssub.s32 %s81, %s84
      %p86 = scmp.eq.s32.totalorder %s85, 0
      %s88 = sadd.s32 %s87, 1
      %s89 = scalar_select %p86, %s87, %s88
      %p92 = pneg %p86
      %p93 = scmp.eq.s32.totalorder %s27, 1
      %p94 = por %p92, %p93
      %p95 = scmp.ne.s32.totalorder %s87, %s90
      %p96 = scmp.eq.s32.totalorder %s27, 0
      %p97 = por %p95, %p96
      %p98 = scmp.ne.s32.totalorder %s87, %s90
      %p99 = scmp.eq.s32.totalorder %s32, 1
      %p100 = por %p98, %p99
      %p101 = scmp.ne.s32.totalorder %s90, %s91
      %p102 = scmp.eq.s32.totalorder %s32, 0
      %p103 = por %p101, %p102
      %p104 = scmp.ne.s32.totalorder %s90, %s91
      %p105 = scmp.eq.s32.totalorder %s33, 1
      %p106 = por %p104, %p105
      %p108 = scmp.ne.s32.totalorder %s91, %s107
      %p109 = scmp.eq.s32.totalorder %s33, 0
      %p110 = por %p108, %p109
      %s111 = ssub.s32 %s34, %s46
      %p112 = scmp.eq.s32.totalorder %s111, 0
      %s114 = sadd.s32 %s113, 1
      %s115 = scalar_select %p112, %s113, %s114
      %p118 = pneg %p112
      %p119 = scmp.eq.s32.totalorder %s27, 1
      %p120 = por %p118, %p119
      %p121 = scmp.ne.s32.totalorder %s113, %s116
      %p122 = scmp.eq.s32.totalorder %s27, 0
      %p123 = por %p121, %p122
      %p124 = scmp.ne.s32.totalorder %s113, %s116
      %p125 = scmp.eq.s32.totalorder %s32, 1
      %p126 = por %p124, %p125
      %p127 = scmp.ne.s32.totalorder %s116, %s117
      %p128 = scmp.eq.s32.totalorder %s32, 0
      %p129 = por %p127, %p128
      %p130 = scmp.ne.s32.totalorder %s116, %s117
      %p131 = scmp.eq.s32.totalorder %s33, 1
      %p132 = por %p130, %p131
      %p134 = scmp.ne.s32.totalorder %s117, %s133
      %p135 = scmp.eq.s32.totalorder %s33, 0
      %p136 = por %p134, %p135
      %s137 = ssub.s32 %s34, %s46
      %p138 = scmp.eq.s32.totalorder %s137, 0
      %s140 = sadd.s32 %s139, 1
      %s141 = scalar_select %p138, %s139, %s140
      %p144 = pneg %p138
      %p145 = scmp.eq.s32.totalorder %s27, 1
      %p146 = por %p144, %p145
      %p147 = scmp.ne.s32.totalorder %s139, %s142
      %p148 = scmp.eq.s32.totalorder %s27, 0
      %p149 = por %p147, %p148
      %p150 = scmp.ne.s32.totalorder %s139, %s142
      %p151 = scmp.eq.s32.totalorder %s32, 1
      %p152 = por %p150, %p151
      %p153 = scmp.ne.s32.totalorder %s142, %s143
      %p154 = scmp.eq.s32.totalorder %s32, 0
      %p155 = por %p153, %p154
      %p156 = scmp.ne.s32.totalorder %s142, %s143
      %p157 = scmp.eq.s32.totalorder %s33, 1
      %p158 = por %p156, %p157
      %p160 = scmp.ne.s32.totalorder %s143, %s159
      %p161 = scmp.eq.s32.totalorder %s33, 0
      %p162 = por %p160, %p161
      %s163 = ssub.s32 %s34, %s46
      %p164 = scmp.eq.s32.totalorder %s163, 0
      %s166 = sadd.s32 %s165, 1
      %s167 = scalar_select %p164, %s165, %s166
      %p170 = pneg %p164
      %p171 = scmp.eq.s32.totalorder %s27, 1
      %p172 = por %p170, %p171
      %p173 = scmp.ne.s32.totalorder %s165, %s168
      %p174 = scmp.eq.s32.totalorder %s27, 0
      %p175 = por %p173, %p174
      %p176 = scmp.ne.s32.totalorder %s165, %s168
      %p177 = scmp.eq.s32.totalorder %s32, 1
      %p178 = por %p176, %p177
      %p179 = scmp.ne.s32.totalorder %s168, %s169
      %p180 = scmp.eq.s32.totalorder %s32, 0
      %p181 = por %p179, %p180
      %p182 = scmp.ne.s32.totalorder %s168, %s169
      %p183 = scmp.eq.s32.totalorder %s33, 1
      %p184 = por %p182, %p183
      %p186 = scmp.ne.s32.totalorder %s169, %s185
      %p187 = scmp.eq.s32.totalorder %s33, 0
      %p188 = por %p186, %p187
      %s189 = ssub.s32 %s34, %s46
      %p190 = scmp.eq.s32.totalorder %s189, 0
      %s192 = sadd.s32 %s191, 1
      %s193 = scalar_select %p190, %s191, %s192
      %p196 = pneg %p190
      %p197 = scmp.eq.s32.totalorder %s27, 1
      %p198 = por %p196, %p197
      %p199 = scmp.ne.s32.totalorder %s191, %s194
      %p200 = scmp.eq.s32.totalorder %s27, 0
      %p201 = por %p199, %p200
      %p202 = scmp.ne.s32.totalorder %s191, %s194
      %p203 = scmp.eq.s32.totalorder %s32, 1
      %p204 = por %p202, %p203
      %p205 = scmp.ne.s32.totalorder %s194, %s195
      %p206 = scmp.eq.s32.totalorder %s32, 0
      %p207 = por %p205, %p206
      %p208 = scmp.ne.s32.totalorder %s194, %s195
      %p209 = scmp.eq.s32.totalorder %s33, 1
      %p210 = por %p208, %p209
      %p212 = scmp.ne.s32.totalorder %s195, %s211
      %p213 = scmp.eq.s32.totalorder %s33, 0
      %p214 = por %p212, %p213
      %p215 = scmp.le.s32.totalorder 1, %s27
      %p216 = scmp.lt.s32.totalorder %s27, 3
      %p217 = pnand %p215, %p216
      %p218 = pneg %p217
      // Predicated region
      $region9: #{tpu_custom_call.1} parent=5 // pred_check
        _
      $region10: #{tpu_custom_call.1} parent=5 // pred_check_branch
        %220 = sbr.rel (%p217) target = $region12
      $region11: #{tpu_custom_call.1} parent=5 // pred_region
        %s221 = ssub.s32 %s27, 1
      $region12: #{tpu_custom_call.1} parent=5 // pred_fallthru
        _
      %p222 = scmp.lt.s32.totalorder %s27, 2
      // Predicated region
      $region13: #{tpu_custom_call.1} parent=5 // pred_check
        %p223 = pneg %p222
      $region14: #{tpu_custom_call.1} parent=5 // pred_check_branch
        %225 = sbr.rel (%p223) target = $region16
      $region15: #{tpu_custom_call.1} parent=5 // pred_region
        // Predicated region
        $region17: #{tpu_custom_call.1} parent=15 // pred_check
          %p226 = pneg %p65
        $region18: #{tpu_custom_call.1} parent=15 // pred_check_branch
          %228 = sbr.rel (%p226) target = $region20
        $region19: #{tpu_custom_call.1} parent=15 // pred_region
          %s229 = sand.u32 %s55, 1
          %s230 = scalar_lea.sflag [#allocation3], %s229
          %s231 = sand.u32 %s55, 1
          %s232 = smul.addr %s231, 16
          %s233 = scalar_lea.vmem [#allocation2], %s232
          %s234 = sadd.s32 %s34, %s35
          %p235 = scmp.lt.s32.totalorder %s234, 0
          %s236 = scalar_select %p235, %s234, 0
          %s237 = smul.u32 2, %s236
          %239 = vsyncadd %s230, 0
          %s240 = smul.addr %s237, 8
          %s241 = scalar_lea.hbm %s0, %s240
          %s242 = sshll.u32 %s241, 4
          %s243 = int_to_ptr.hbm [resolvable:$true] %s242
          %s244 = sshll.u32 %s233, 4
          %s245 = int_to_ptr.vmem [resolvable:$true] %s244
          %250 = dma.hbm_to_vmem [thread:$0]  %s243, 256, %s245, %s230, 128, 128, 8
        $region20: #{tpu_custom_call.1} parent=15 // pred_fallthru
          _
        // Predicated region
        $region21: #{tpu_custom_call.1} parent=15 // pred_check
          %p251 = pneg %p97
        $region22: #{tpu_custom_call.1} parent=15 // pred_check_branch
          %253 = sbr.rel (%p251) target = $region24
        $region23: #{tpu_custom_call.1} parent=15 // pred_region
          %s254 = sand.u32 %s87, 1
          %s255 = scalar_lea.sflag [#allocation6], %s254
          %s256 = sand.u32 %s87, 1
          %s257 = smul.addr %s256, 16
          %s258 = scalar_lea.vmem [#allocation5], %s257
          %s259 = sadd.s32 %s34, %s35
          %p260 = scmp.lt.s32.totalorder %s259, 0
          %s261 = scalar_select %p260, %s259, 0
          %s262 = smul.u32 2, %s261
          %264 = vsyncadd %s255, 0
          %s265 = smul.addr %s262, 8
          %s266 = scalar_lea.hbm %s1, %s265
          %s267 = sshll.u32 %s266, 4
          %s268 = int_to_ptr.hbm [resolvable:$true] %s267
          %s269 = sshll.u32 %s258, 4
          %s270 = int_to_ptr.vmem [resolvable:$true] %s269
          %275 = dma.hbm_to_vmem [thread:$0]  %s268, 256, %s270, %s255, 128, 128, 8
        $region24: #{tpu_custom_call.1} parent=15 // pred_fallthru
          _
      $region16: #{tpu_custom_call.1} parent=5 // pred_fallthru
        _
      %p276 = scmp.le.s32.totalorder 1, %s27
      %p277 = scmp.lt.s32.totalorder %s27, 3
      %p278 = pnand %p276, %p277
      %p279 = pneg %p278
      // Predicated region
      $region25: #{tpu_custom_call.1} parent=5 // pred_check
        _
      $region26: #{tpu_custom_call.1} parent=5 // pred_check_branch
        %281 = sbr.rel (%p278) target = $region28
      $region27: #{tpu_custom_call.1} parent=5 // pred_region
        %s282 = ssub.s32 %s27, 1
        %s283 = sand.u32 %s58, 1
        %s284 = scalar_lea.sflag [#allocation3], %s283
        %s285 = sand.u32 %s58, 1
        %s286 = smul.addr %s285, 16
        %s287 = scalar_lea.vmem [#allocation2], %s286
        // Predicated region
        $region29: #{tpu_custom_call.1} parent=27 // pred_check
          %p288 = pneg %p71
        $region30: #{tpu_custom_call.1} parent=27 // pred_check_branch
          %290 = sbr.rel (%p288) target = $region32
        $region31: #{tpu_custom_call.1} parent=27 // pred_region
          %292 = dma.done %s284, 256
        $region32: #{tpu_custom_call.1} parent=27 // pred_fallthru
          _
        %s293 = sand.u32 %s90, 1
        %s294 = scalar_lea.sflag [#allocation6], %s293
        %s295 = sand.u32 %s90, 1
        %s296 = smul.addr %s295, 16
        %s297 = scalar_lea.vmem [#allocation5], %s296
        // Predicated region
        $region33: #{tpu_custom_call.1} parent=27 // pred_check
          %p298 = pneg %p103
        $region34: #{tpu_custom_call.1} parent=27 // pred_check_branch
          %300 = sbr.rel (%p298) target = $region36
        $region35: #{tpu_custom_call.1} parent=27 // pred_region
          %302 = dma.done %s294, 256
        $region36: #{tpu_custom_call.1} parent=27 // pred_fallthru
          _
        %s303 = sand.u32 %s58, 1
        %s304 = scalar_lea.sflag [#allocation3], %s303
        %s305 = sand.u32 %s58, 1
        %s306 = smul.addr %s305, 16
        %s307 = scalar_lea.vmem [#allocation2], %s306
        %p308 = pneg %p71
        %p309 = pneg %p68
        %s310 = sand.u32 %s90, 1
        %s311 = scalar_lea.sflag [#allocation6], %s310
        %s312 = sand.u32 %s90, 1
        %s313 = smul.addr %s312, 16
        %s314 = scalar_lea.vmem [#allocation5], %s313
        %p315 = pneg %p103
        %p316 = pneg %p100
        %p317 = pneg %p129
        %p318 = pneg %p126
        %s319 = sand.u32 %s116, 1
        %s320 = scalar_lea.sflag [#allocation4], %s319
        %s321 = sand.u32 %s116, 1
        %s322 = smul.addr %s321, 8
        %s323 = scalar_lea.vmem [#allocation7], %s322
        %p324 = pneg %p155
        %p325 = pneg %p152
        %s326 = sand.u32 %s32, 1
        %s327 = scalar_lea.sflag [#allocation9], %s326
        %s328 = sand.u32 %s142, 1
        %s329 = smul.addr %s328, 8
        %s330 = scalar_lea.vmem [#allocation8], %s329
        %p331 = pneg %p181
        %p332 = pneg %p178
        %s333 = sand.u32 %s32, 1
        %s334 = scalar_lea.sflag [#allocation9], %s333
        %s335 = sand.u32 %s168, 1
        %s336 = smul.addr %s335, 8
        %s337 = scalar_lea.vmem [#allocation10], %s336
        %p338 = pneg %p207
        %p339 = pneg %p204
        %s340 = sand.u32 %s194, 1
        %s341 = scalar_lea.sflag [#allocation12], %s340
        %s342 = sand.u32 %s194, 1
        %s343 = smul.addr %s342, 8
        %s344 = scalar_lea.vmem [#allocation11], %s343
        %s345 = sadd.s32 %s36, %s37
        %p346 = scmp.lt.s32.totalorder %s345, 0
        %s347 = scalar_select %p346, %s345, 0
        %s348 = smul.u32 2, %s347
        %s349 = sadd.s32 %s36, %s37
        %p350 = scmp.lt.s32.totalorder %s349, 0
        %s351 = scalar_select %p350, %s349, 0
        %s352 = smul.u32 2, %s351
        %p353 = scmp.eq.s32.totalorder %s37, 0
        // Predicated region
        $region37: #{tpu_custom_call.1} parent=27 // pred_check
          %p354 = pneg %p353
        $region38: #{tpu_custom_call.1} parent=27 // pred_check_branch
          %356 = sbr.rel (%p354) target = $region40
        $region39: #{tpu_custom_call.1} parent=27 // pred_region
          %357 = vst [vmem:[%s323] sm:$0xff] 0.0
          %358 = vst [vmem:[%s330] sm:$0xff] 0.0
          %359 = vst [vmem:[%s337] sm:$0xff] 0.0
          %360 = vst [vmem:[%s344] sm:$0xff] 0.0
        $region40: #{tpu_custom_call.1} parent=27 // pred_fallthru
          _
        %s361 = sadd.s32 %s36, %s37
        %v362 = vlaneseq
        %v363 = vshrl.u32 %v362, 7
        %v364 = vadd.s32 %v363, 8
        %v365 = vlaneseq
        %v366 = vand.u32 %v365, 127
        %s367 = smul.u32 %s361, 16
        %v368 = vstv %s367
        %v369 = vadd.s32 %v368, %v363
        %v370 = vadd.s32 %v368, %v364
        %v371 = vmul.u32 %v369, 128
        %v372 = vmul.u32 %v370, 128
        %v373 = vadd.s32 %v371, %v366
        %v374 = vadd.s32 %v372, %v366
        %vm375 = vcmp.lt.s32.totalorder %v373, 2048
        %vm376 = vcmp.lt.s32.totalorder %v374, 2048
        %v377 = vld [vmem:[%s287] sm:$0xff]
        %v378 = vld [vmem:[%s287 + $0x8] sm:$0xff]
        %v379 = vsel %vm375, %v377, 0.0
        %v380 = vsel %vm376, %v378, 0.0
        %v381 = vld [vmem:[%s297] sm:$0xff]
        %v382 = vld [vmem:[%s297 + $0x8] sm:$0xff]
        %v383 = vsel %vm375, %v381, 0.0
        %v384 = vsel %vm376, %v382, 0.0
        %v385 = vand.u32 2147483647, %v379
        %v386 = vand.u32 2147483647, %v380
        %v387 = vsub.f32 0.0, %v385
        %v388 = vsub.f32 0.0, %v386
        %v389 = vmul.f32 %v387, 1.442695
        %v390 = vpow.pop %v389
        %v391 = vmul.f32 %v388, 1.442695
        %v392 = vpow.pop %v391
        %v393 = vadd.f32 %v390, 1.0
        %v394 = vadd.f32 %v392, 1.0
        %v395 = vrcp.pop %v393
        %v396 = vmul.f32 %v393, %v395
        %v397 = vsub.f32 1.0, %v396
        %v398 = vmul.f32 %v395, %v397
        %v399 = vadd.f32 %v395, %v398
        %vm400 = vweird.f32 %v393
        %vm401 = vweird.f32 %v395
        %vm402 = vmor %vm400, %vm401
        %v403 = vsel %vm402, %v395, %v399
        %v404 = vand.u32 2147483647, %v393
        %vm405 = vcmp.eq.f32.partialorder %v404, 8.507059e+37
        %v406 = vand.u32 %v393, 2147483648
        %v407 = vor.u32 1.1754944e-38, %v406
        %v408 = vsel %vm405, %v407, %v403
        %v409 = vmul.f32 1.0, %v408
        %v410 = vrcp.pop %v394
        %v411 = vmul.f32 %v394, %v410
        %v412 = vsub.f32 1.0, %v411
        %v413 = vmul.f32 %v410, %v412
        %v414 = vadd.f32 %v410, %v413
        %vm415 = vweird.f32 %v394
        %vm416 = vweird.f32 %v410
        %vm417 = vmor %vm415, %vm416
        %v418 = vsel %vm417, %v410, %v414
        %v419 = vand.u32 2147483647, %v394
        %vm420 = vcmp.eq.f32.partialorder %v419, 8.507059e+37
        %v421 = vand.u32 %v394, 2147483648
        %v422 = vor.u32 1.1754944e-38, %v421
        %v423 = vsel %vm420, %v422, %v418
        %v424 = vmul.f32 1.0, %v423
        %vm425 = vcmp.ge.f32.partialorder %v379, 0.0
        %vm426 = vcmp.ge.f32.partialorder %v380, 0.0
        %v427 = vmul.f32 %v390, %v409
        %v428 = vmul.f32 %v392, %v424
        %v429 = vsel %vm425, %v409, %v427
        %v430 = vsel %vm426, %v424, %v428
        %v431 = vmax.f32 %v379, 0.0
        %v432 = vmax.f32 %v380, 0.0
        %v433 = vmul.f32 %v379, %v383
        %v434 = vmul.f32 %v380, %v384
        %v435 = vsub.f32 %v431, %v433
        %v436 = vsub.f32 %v432, %v434
        %v437 = vadd.f32 %v390, 1.0
        %v438 = vlog2.pop %v437
        %v439 = vmul.f32 %v438, 0.6931472
        %v440 = vmul.f32 -0.5, %v390
        %v441 = vadd.f32 %v440, 1.0
        %v442 = vmul.f32 %v441, %v390
        %v443 = vand.u32 2147483647, %v390
        %vm444 = vcmp.lt.f32.partialorder %v443, 0.0004427343
        %v445 = vsel %vm444, %v442, %v439
        %v446 = vadd.f32 %v392, 1.0
        %v447 = vlog2.pop %v446
        %v448 = vmul.f32 %v447, 0.6931472
        %v449 = vmul.f32 -0.5, %v392
        %v450 = vadd.f32 %v449, 1.0
        %v451 = vmul.f32 %v450, %v392
        %v452 = vand.u32 2147483647, %v392
        %vm453 = vcmp.lt.f32.partialorder %v452, 0.0004427343
        %v454 = vsel %vm453, %v451, %v448
        %v455 = vadd.f32 %v435, %v445
        %v456 = vadd.f32 %v436, %v454
        %v457 = vsel %vm375, %v455, 0.0
        %v458 = vsel %vm376, %v456, 0.0
        %v459 = vsel %vm375, %v429, 0.0
        %v460 = vsel %vm376, %v430, 0.0
        %v461 = vld [vmem:[%s323] sm:$0xff]
        %v462 = vadd.f32 %v457, %v458
        %v463 = vadd.f32 %v461, %v462
        %464 = vst [vmem:[%s323] sm:$0xff] %v463
        %v465 = vmul.f32 %v459, %v383
        %v466 = vmul.f32 %v460, %v384
        %v467 = vld [vmem:[%s330] sm:$0xff]
        %v468 = vadd.f32 %v465, %v466
        %v469 = vadd.f32 %v467, %v468
        %470 = vst [vmem:[%s330] sm:$0xff] %v469
        %v471 = vld [vmem:[%s337] sm:$0xff]
        %v472 = vadd.f32 %v459, %v460
        %v473 = vadd.f32 %v471, %v472
        %474 = vst [vmem:[%s337] sm:$0xff] %v473
        %v475 = vld [vmem:[%s344] sm:$0xff]
        %v476 = vadd.f32 %v383, %v384
        %v477 = vadd.f32 %v475, %v476
        %478 = vst [vmem:[%s344] sm:$0xff] %v477
        %s479 = sand.u32 %s116, 1
        %s480 = scalar_lea.sflag [#allocation4], %s479
        %s481 = sand.u32 %s116, 1
        %s482 = smul.addr %s481, 8
        %s483 = scalar_lea.vmem [#allocation7], %s482
        %s484 = sand.u32 %s32, 1
        %s485 = scalar_lea.sflag [#allocation9], %s484
        %s486 = sand.u32 %s142, 1
        %s487 = smul.addr %s486, 8
        %s488 = scalar_lea.vmem [#allocation8], %s487
        %s489 = sand.u32 %s32, 1
        %s490 = scalar_lea.sflag [#allocation9], %s489
        %s491 = sand.u32 %s168, 1
        %s492 = smul.addr %s491, 8
        %s493 = scalar_lea.vmem [#allocation10], %s492
        %s494 = sand.u32 %s194, 1
        %s495 = scalar_lea.sflag [#allocation12], %s494
        %s496 = sand.u32 %s194, 1
        %s497 = smul.addr %s496, 8
        %s498 = scalar_lea.vmem [#allocation11], %s497
        // Predicated region
        $region41: #{tpu_custom_call.1} parent=27 // pred_check
          %p499 = pneg %p126
        $region42: #{tpu_custom_call.1} parent=27 // pred_check_branch
          %501 = sbr.rel (%p499) target = $region44
        $region43: #{tpu_custom_call.1} parent=27 // pred_region
          %503 = vsyncadd %s480, 0
          %s504 = smul.addr %s36, 8
          %s505 = scalar_lea.hbm %s2, %s504
          %s507 = sshll.u32 %s483, 4
          %s508 = int_to_ptr.vmem [resolvable:$true] %s507
          %s509 = sshll.u32 %s505, 4
          %s510 = int_to_ptr.hbm [resolvable:$true] %s509
          %512 = dma.vmem_to_hbm [thread:$0]  %s508, 128, %s510, %s480
        $region44: #{tpu_custom_call.1} parent=27 // pred_fallthru
          _
        // Predicated region
        $region45: #{tpu_custom_call.1} parent=27 // pred_check
          %p513 = pneg %p152
        $region46: #{tpu_custom_call.1} parent=27 // pred_check_branch
          %515 = sbr.rel (%p513) target = $region48
        $region47: #{tpu_custom_call.1} parent=27 // pred_region
          %517 = vsyncadd %s485, 0
          %s518 = smul.addr %s36, 8
          %s519 = scalar_lea.hbm %s3, %s518
          %s521 = sshll.u32 %s488, 4
          %s522 = int_to_ptr.vmem [resolvable:$true] %s521
          %s523 = sshll.u32 %s519, 4
          %s524 = int_to_ptr.hbm [resolvable:$true] %s523
          %526 = dma.vmem_to_hbm [thread:$0]  %s522, 128, %s524, %s485
        $region48: #{tpu_custom_call.1} parent=27 // pred_fallthru
          _
        // Predicated region
        $region49: #{tpu_custom_call.1} parent=27 // pred_check
          %p527 = pneg %p178
        $region50: #{tpu_custom_call.1} parent=27 // pred_check_branch
          %529 = sbr.rel (%p527) target = $region52
        $region51: #{tpu_custom_call.1} parent=27 // pred_region
          %531 = vsyncadd %s490, 0
          %s532 = smul.addr %s36, 8
          %s533 = scalar_lea.hbm %s4, %s532
          %s535 = sshll.u32 %s493, 4
          %s536 = int_to_ptr.vmem [resolvable:$true] %s535
          %s537 = sshll.u32 %s533, 4
          %s538 = int_to_ptr.hbm [resolvable:$true] %s537
          %540 = dma.vmem_to_hbm [thread:$0]  %s536, 128, %s538, %s490
        $region52: #{tpu_custom_call.1} parent=27 // pred_fallthru
          _
        // Predicated region
        $region53: #{tpu_custom_call.1} parent=27 // pred_check
          %p541 = pneg %p204
        $region54: #{tpu_custom_call.1} parent=27 // pred_check_branch
          %543 = sbr.rel (%p541) target = $region56
        $region55: #{tpu_custom_call.1} parent=27 // pred_region
          %545 = vsyncadd %s495, 0
          %s546 = smul.addr %s36, 8
          %s547 = scalar_lea.hbm %s5, %s546
          %s549 = sshll.u32 %s498, 4
          %s550 = int_to_ptr.vmem [resolvable:$true] %s549
          %s551 = sshll.u32 %s547, 4
          %s552 = int_to_ptr.hbm [resolvable:$true] %s551
          %554 = dma.vmem_to_hbm [thread:$0]  %s550, 128, %s552, %s495
        $region56: #{tpu_custom_call.1} parent=27 // pred_fallthru
          _
      $region28: #{tpu_custom_call.1} parent=5 // pred_fallthru
        _
      %p555 = scmp.le.s32.totalorder 2, %s27
      // Predicated region
      $region57: #{tpu_custom_call.1} parent=5 // pred_check
        %p556 = pneg %p555
      $region58: #{tpu_custom_call.1} parent=5 // pred_check_branch
        %558 = sbr.rel (%p556) target = $region60
      $region59: #{tpu_custom_call.1} parent=5 // pred_region
        %s559 = ssub.s32 %s27, 2
        // Predicated region
        $region61: #{tpu_custom_call.1} parent=59 // pred_check
          %p560 = pneg %p132
        $region62: #{tpu_custom_call.1} parent=59 // pred_check_branch
          %562 = sbr.rel (%p560) target = $region64
        $region63: #{tpu_custom_call.1} parent=59 // pred_region
          %s563 = sand.u32 %s117, 1
          %s564 = scalar_lea.sflag [#allocation4], %s563
          %s565 = sand.u32 %s117, 1
          %s566 = smul.addr %s565, 8
          %s567 = scalar_lea.vmem [#allocation7], %s566
          %569 = dma.done %s564, 128
        $region64: #{tpu_custom_call.1} parent=59 // pred_fallthru
          _
        // Predicated region
        $region65: #{tpu_custom_call.1} parent=59 // pred_check
          %p570 = pneg %p158
        $region66: #{tpu_custom_call.1} parent=59 // pred_check_branch
          %572 = sbr.rel (%p570) target = $region68
        $region67: #{tpu_custom_call.1} parent=59 // pred_region
          %s573 = sand.u32 %s33, 1
          %s574 = scalar_lea.sflag [#allocation9], %s573
          %s575 = sand.u32 %s143, 1
          %s576 = smul.addr %s575, 8
          %s577 = scalar_lea.vmem [#allocation8], %s576
          %579 = dma.done %s574, 128
        $region68: #{tpu_custom_call.1} parent=59 // pred_fallthru
          _
        // Predicated region
        $region69: #{tpu_custom_call.1} parent=59 // pred_check
          %p580 = pneg %p184
        $region70: #{tpu_custom_call.1} parent=59 // pred_check_branch
          %582 = sbr.rel (%p580) target = $region72
        $region71: #{tpu_custom_call.1} parent=59 // pred_region
          %s583 = sand.u32 %s33, 1
          %s584 = scalar_lea.sflag [#allocation9], %s583
          %s585 = sand.u32 %s169, 1
          %s586 = smul.addr %s585, 8
          %s587 = scalar_lea.vmem [#allocation10], %s586
          %589 = dma.done %s584, 128
        $region72: #{tpu_custom_call.1} parent=59 // pred_fallthru
          _
        // Predicated region
        $region73: #{tpu_custom_call.1} parent=59 // pred_check
          %p590 = pneg %p210
        $region74: #{tpu_custom_call.1} parent=59 // pred_check_branch
          %592 = sbr.rel (%p590) target = $region76
        $region75: #{tpu_custom_call.1} parent=59 // pred_region
          %s593 = sand.u32 %s195, 1
          %s594 = scalar_lea.sflag [#allocation12], %s593
          %s595 = sand.u32 %s195, 1
          %s596 = smul.addr %s595, 8
          %s597 = scalar_lea.vmem [#allocation11], %s596
          %599 = dma.done %s594, 128
        $region76: #{tpu_custom_call.1} parent=59 // pred_fallthru
          _
      $region60: #{tpu_custom_call.1} parent=5 // pred_fallthru
        _
    $region6: #{tpu_custom_call.1} parent=1 // loop_footer
      %s31 = sadd.s32 1, %s27
    $region7: #{tpu_custom_call.1} parent=1 // loop_footer_branch
      %26 = sbr.rel target = $region3
    $region8: #{tpu_custom_call.1} parent=1 // loop_exit
      _
    %600 = vsyncpa [#allocation3], 1
    %s601 = scalar_lea.sflag [#allocation3], 1
    %602 = vsyncpa %s601, 1
    %603 = vsyncpa [#allocation6], 1
    %s604 = scalar_lea.sflag [#allocation6], 1
    %605 = vsyncpa %s604, 1
    %606 = vsyncpa [#allocation4], 1
    %s607 = scalar_lea.sflag [#allocation4], 1
    %608 = vsyncpa %s607, 1
    %609 = vsyncpa [#allocation9], 1
    %s610 = scalar_lea.sflag [#allocation9], 1
    %611 = vsyncpa %s610, 1
    %612 = vsyncpa [#allocation12], 1
    %s613 = scalar_lea.sflag [#allocation12], 1
    %614 = vsyncpa %s613, 1

</llo_original>
